<compile_context>
chip_gen: v7x
topology: tpu7x:2x2x1
jax: 0.10.0
libtpu: 0.0.40
codegen_flags: <defaults>
</compile_context>

<pallas_src>
import jax
import jax.numpy as jnp
from jax.experimental import pallas as pl
from jax.experimental.pallas import tpu as pltpu


def _round_up(v, m):
    return ((v + m - 1) // m) * m


def _pick_tile(dim, quantum, max_tile, min_tile):
    """Pick a tile (multiple of `quantum`, in [min_tile, max_tile]) minimizing
    padding of `dim`; larger tiles win ties. If dim fits one block, use it."""
    dim_q = _round_up(dim, quantum)
    if dim_q <= max_tile:
        return dim_q
    best_t, best_pad = None, None
    t = max_tile
    while t >= min_tile:
        tq = max(min_tile, (t // quantum) * quantum)
        pad = _round_up(dim_q, tq) - dim_q
        if best_pad is None or pad < best_pad:
            best_t, best_pad = tq, pad
        t //= 2
    return best_t


def _mm_kernel_out_acc(x_ref, w_ref, o_ref):
    """f32 output: accumulate directly into the output tile (resident across K)."""
    k = pl.program_id(2)
    p = jnp.dot(x_ref[...], w_ref[...], preferred_element_type=jnp.float32)

    @pl.when(k == 0)
    def _():
        o_ref[...] = p

    @pl.when(k > 0)
    def _():
        o_ref[...] += p


def _mm_kernel_scratch_acc(x_ref, w_ref, o_ref, acc_ref):
    """Narrow output dtype: f32 scratch accumulator, cast on the last K step."""
    k = pl.program_id(2)
    p = jnp.dot(x_ref[...], w_ref[...], preferred_element_type=jnp.float32)

    @pl.when(k == 0)
    def _():
        acc_ref[...] = p

    @pl.when(k > 0)
    def _():
        acc_ref[...] += p

    @pl.when(k == pl.num_programs(2) - 1)
    def _():
        o_ref[...] = acc_ref[...].astype(o_ref.dtype)


def meta_linear(x, weight, *, weight_t=None, tm=512, tn=512, tk=512,
                compute_dtype=None, fast_path_max_elems=1 << 16):
    """Pallas equivalent of MetaLinear.forward: F.linear(x, weight), no bias.

    x:        (..., K)
    weight:   (N, K)   -- nn.Linear layout
    weight_t: optional pre-transposed (K, N) weight (hoists per-call transpose)
    compute_dtype: optional operand dtype (e.g. jnp.bfloat16) for near-peak MXU;
              accumulation stays f32, output dtype unchanged. Opt-in only.
    """
    *lead, k = x.shape
    n, kw = weight.shape
    assert k == kw, f"in_features mismatch: {k} vs {kw}"

    m = 1
    for d in lead:
        m *= d
    out_dtype = x.dtype

    if m == 0:  # degenerate empty batch
        return jnp.zeros((*lead, n), dtype=out_dtype)

    # Tiny problems: grid / pad / slice overhead dwarfs the matmul -> plain dot.
    if m * n * k <= fast_path_max_elems:
        w_kn = weight_t if weight_t is not None else weight.T
        return jnp.dot(x.reshape(m, k), w_kn).astype(out_dtype).reshape(*lead, n)

    x2d = x.reshape(m, k)
    w_kn = weight_t if weight_t is not None else weight.T   # (K, N): MXU-native RHS
    assert w_kn.shape == (k, n)

    # ---- tile selection -------------------------------------------------
    tm = max(8, (tm // 8) * 8)
    tn = max(128, (tn // 128) * 128)
    tk = max(128, (tk // 128) * 128)

    tm = _pick_tile(m, 8, tm, min(128, tm))
    tn = _pick_tile(n, 128, tn, 128)
    if k <= tk:
        tk, kp = k, k                 # single K block: no K padding (full-dim rule)
    else:
        tk = _pick_tile(k, 128, tk, 128)
        kp = _round_up(k, tk)

    mp = _round_up(m, tm)
    np_ = _round_up(n, tn)

    # v7x has 2 TensorCores: ensure the 'parallel' axes have >= 2 blocks when
    # splittable so both cores get work (costs one grid step on 1-TC parts).
    if (mp // tm) * (np_ // tn) < 2:
        if _round_up(m, 8) >= 16:
            tm = _round_up((_round_up(m, 8) + 1) // 2, 8)
            mp = _round_up(m, tm)
        elif np_ >= 256:
            tn = _round_up(np_ // 2, 128)
            np_ = _round_up(n, tn)

    # ---- padding (K zero-pad is exact; padded M/N rows/cols sliced off) --
    if (mp, kp) != (m, k):
        x2d = jnp.pad(x2d, ((0, mp - m), (0, kp - k)))
    if (kp, np_) != (k, n):
        w_kn = jnp.pad(w_kn, ((0, kp - k), (0, np_ - n)))

    if compute_dtype is not None:
        x2d = x2d.astype(compute_dtype)
        w_kn = w_kn.astype(compute_dtype)

    grid = (mp // tm, np_ // tn, kp // tk)

    acc_in_out = jnp.dtype(out_dtype) == jnp.float32
    kernel = _mm_kernel_out_acc if acc_in_out else _mm_kernel_scratch_acc
    scratch = [] if acc_in_out else [pltpu.VMEM((tm, tn), jnp.float32)]

    # VMEM budget: double-buffered inputs + output (+ acc) with headroom.
    # Raising the limit covers v5e's 16 MiB scoped default; cap at v7x's
    # 64 MiB physical VMEM.
    est = (2 * (tm * tk * x2d.dtype.itemsize + tk * tn * w_kn.dtype.itemsize)
           + 2 * tm * tn * jnp.dtype(out_dtype).itemsize
           + (0 if acc_in_out else tm * tn * 4))
    vmem_limit = min(max(int(1.25 * est) + (4 << 20), 16 << 20), 64 << 20)

    out2d = pl.pallas_call(
        kernel,
        out_shape=jax.ShapeDtypeStruct((mp, np_), out_dtype),
        grid=grid,
        in_specs=[
            pl.BlockSpec((tm, tk), lambda i, j, kk: (i, kk)),
            pl.BlockSpec((tk, tn), lambda i, j, kk: (kk, j)),
        ],
        out_specs=pl.BlockSpec((tm, tn), lambda i, j, kk: (i, j)),
        scratch_shapes=scratch,
        compiler_params=pltpu.CompilerParams(
            dimension_semantics=("parallel", "parallel", "arbitrary"),
            vmem_limit_bytes=vmem_limit,
        ),
    )(x2d, w_kn)

    out2d = out2d[:m, :n]
    return out2d.reshape(*lead, n)


class MetaLinear:
    """JAX/Pallas analogue of the PyTorch MetaLinear (weight-only linear).

    Caches weight.T at construction so the per-forward path never
    re-materializes the transposed weight in HBM.
    """

    def __init__(self, weight):
        self.weight = jnp.asarray(weight)      # (out_features, in_features)
        self.weight_t = self.weight.T          # (in_features, out_features), cached

    def __call__(self, x, **kwargs):
        return meta_linear(x, self.weight, weight_t=self.weight_t, **kwargs)


if __name__ == "__main__":
    key = jax.random.PRNGKey(0)
    kx, kw, kx2, kw2, kx4, kw4 = jax.random.split(key, 6)

    # --- 1) Module-scale classifier-head shapes (tiny -> fast path). ---------
    batch, seq = 2, 8
    in_features, out_features = 32, 64
    x = jax.random.normal(kx, (batch, seq, in_features), dtype=jnp.float32)
    bound = 1.0 / (in_features ** 0.5)  # nn.Linear kaiming-uniform bound
    weight = jax.random.uniform(kw, (out_features, in_features), dtype=jnp.float32,
                                minval=-bound, maxval=bound)
    layer = MetaLinear(weight)
    out = jax.block_until_ready(layer(x))
    ref = jnp.einsum("bsk,nk->bsn", x, weight)
    assert out.shape == (batch, seq, out_features)
    assert jnp.allclose(out, ref, atol=1e-5, rtol=1e-5)

    # --- 2) Ragged problem, small explicit tiles: full 3-D grid, padding, and
    #        direct-f32 output accumulation in the Pallas kernel. -------------
    x2 = jax.random.normal(kx2, (3, 40, 300), dtype=jnp.float32)
    w2 = jax.random.normal(kw2, (200, 300), dtype=jnp.float32) * (1.0 / 300 ** 0.5)
    out2 = jax.block_until_ready(meta_linear(x2, w2, tm=64, tn=128, tk=128))
    ref2 = jnp.einsum("bsk,nk->bsn", x2, w2)
    assert out2.shape == (3, 40, 200)
    assert jnp.allclose(out2, ref2, atol=1e-4, rtol=1e-4)

    # --- 3) Same problem in bf16: exercises the f32 scratch-accumulator path. -
    x3 = x2.astype(jnp.bfloat16)
    w3 = w2.astype(jnp.bfloat16)
    out3 = jax.block_until_ready(meta_linear(x3, w3, tm=64, tn=128, tk=128))
    ref3 = jnp.einsum("bsk,nk->bsn", x3.astype(jnp.float32), w3.astype(jnp.float32))
    assert out3.dtype == jnp.bfloat16
    assert jnp.allclose(out3.astype(jnp.float32), ref3, atol=1e-1, rtol=5e-2)

    # --- 4) Default (512) tiles: single-K-block (no K pad) + the >=2 parallel
    #        block split for dual-TensorCore parts. ---------------------------
    x4 = jax.random.normal(kx4, (4, 128, 256), dtype=jnp.float32)
    w4 = jax.random.normal(kw4, (512, 256), dtype=jnp.float32) * (1.0 / 256 ** 0.5)
    out4 = jax.block_until_ready(meta_linear(x4, w4))
    ref4 = jnp.einsum("bsk,nk->bsn", x4, w4)
    assert out4.shape == (4, 128, 512)
    assert jnp.allclose(out4, ref4, atol=1e-4, rtol=1e-4)

    print("KERNEL_OK")
</pallas_src>

<mosaic_0001>
module attributes {stable_mosaic.version = 11 : i64} {
  func.func @_mm_kernel_out_acc(%arg0: i32, %arg1: i32, %arg2: i32, %arg3: memref<64x128xf32, #tpu.memory_space<vmem>>, %arg4: memref<128x128xf32, #tpu.memory_space<vmem>>, %arg5: memref<64x128xf32, #tpu.memory_space<vmem>>) attributes {dimension_semantics = [#tpu.dimension_semantics<parallel>, #tpu.dimension_semantics<parallel>, #tpu.dimension_semantics<arbitrary>], iteration_bounds = array<i64: 2, 2, 3>, scalar_prefetch = 0 : i64, scratch_operands = 0 : i64, tpu.core_type = #tpu.core_type<tc>, window_params = [{transform_indices = @transform_0, window_bounds = array<i64: 64, 128>}, {transform_indices = @transform_1, window_bounds = array<i64: 128, 128>}, {transform_indices = @transform_2, window_bounds = array<i64: 64, 128>}]} {
    %c0 = arith.constant 0 : index
    %c0_0 = arith.constant 0 : index
    %0 = vector.load %arg3[%c0, %c0_0] : memref<64x128xf32, #tpu.memory_space<vmem>>, vector<64x128xf32>
    %c0_1 = arith.constant 0 : index
    %c0_2 = arith.constant 0 : index
    %1 = vector.load %arg4[%c0_1, %c0_2] : memref<128x128xf32, #tpu.memory_space<vmem>>, vector<128x128xf32>
    %cst = arith.constant dense<0.000000e+00> : vector<64x128xf32>
    %2 = tpu.matmul %0, %1, %cst {dimension_numbers = #tpu.dot_dimension_numbers<[1], [0], [0], [1], [0, 0, 1, 1], [], []>} : vector<64x128xf32>, vector<128x128xf32>, vector<64x128xf32> -> vector<64x128xf32>
    %c0_i32 = arith.constant 0 : i32
    %3 = arith.cmpi eq, %arg2, %c0_i32 : i32
    %4 = arith.extui %3 : i1 to i32
    %c0_i32_3 = arith.constant 0 : i32
    %5 = arith.cmpi ne, %4, %c0_i32_3 : i32
    scf.if %5 {
      %c0_6 = arith.constant 0 : index
      %c0_7 = arith.constant 0 : index
      %9 = vector.load %arg5[%c0_6, %c0_7] : memref<64x128xf32, #tpu.memory_space<vmem>>, vector<64x128xf32>
      tpu.vector_store %arg5[%c0_6, %c0_7], %2 {strides = array<i32>} : memref<64x128xf32, #tpu.memory_space<vmem>>, vector<64x128xf32>,
    } else {
    }
    %c0_i32_4 = arith.constant 0 : i32
    %6 = arith.cmpi sgt, %arg2, %c0_i32_4 : i32
    %7 = arith.extui %6 : i1 to i32
    %c0_i32_5 = arith.constant 0 : i32
    %8 = arith.cmpi ne, %7, %c0_i32_5 : i32
    scf.if %8 {
      %c0_6 = arith.constant 0 : index
      %c0_7 = arith.constant 0 : index
      %9 = vector.load %arg5[%c0_6, %c0_7] : memref<64x128xf32, #tpu.memory_space<vmem>>, vector<64x128xf32>
      %10 = arith.addf %9, %2 : vector<64x128xf32>
      %c0_8 = arith.constant 0 : index
      %c0_9 = arith.constant 0 : index
      %11 = vector.load %arg5[%c0_8, %c0_9] : memref<64x128xf32, #tpu.memory_space<vmem>>, vector<64x128xf32>
      tpu.vector_store %arg5[%c0_8, %c0_9], %10 {strides = array<i32>} : memref<64x128xf32, #tpu.memory_space<vmem>>, vector<64x128xf32>,
    } else {
    }
    return
  }
  func.func @transform_0(%arg0: i32, %arg1: i32, %arg2: i32) -> (i32, i32) {
    %c0_i32 = arith.constant 0 : i32
    return %arg0, %arg2 : i32, i32
  }
  func.func @transform_1(%arg0: i32, %arg1: i32, %arg2: i32) -> (i32, i32) {
    %c0_i32 = arith.constant 0 : i32
    return %arg2, %arg1 : i32, i32
  }
  func.func @transform_2(%arg0: i32, %arg1: i32, %arg2: i32) -> (i32, i32) {
    %c0_i32 = arith.constant 0 : i32
    return %arg0, %arg1 : i32, i32
  }
}

</mosaic_0001>

<llo_original>
// kernel: tpu_custom_call.1
$region0: #{tpu_custom_call.1}
  #allocation0 [shape = 'u32[]', space=smem, size = 0x4, offset = 0x4, fixed_abs, tag = 'smem constant byte address 0x4 - core index']
  #allocation1 [shape = 'u32[144,128]{1,0:T(1,128)}', space=vmem, size = 0x12000, scoped, tag = 'internal scratch']
  %s0 = inlined_call_operand.hbm [shape: f32[128,384], index: 0, kind: input, shape index: {}]
  %s1 = inlined_call_operand.hbm [shape: f32[384,256], index: 1, kind: input, shape index: {}]
  %s2 = inlined_call_operand.hbm [shape: f32[128,256], index: 2, kind: output, shape index: {}]
  %s3 = sld [smem:[#allocation0]]
  $region57: #{tpu_custom_call.1} parent=0
    _
  %s5 = ssub.s32 1, %s3
  %s6 = scalar_select 0, %s5, %s3
  $region1: #{tpu_custom_call.1} parent=0
    #allocation2 [shape = 'u8[65536]{0}', space=vmem, size = 0x10000, scoped, tag = 'input window, operand 0']
    #allocation3 [shape = 's32[2]{0}', space=sflag, size = 0x8, scoped, tag = 'scoped memory for tpu_custom_call.1']
    #allocation4 [shape = 's32[2]{0}', space=sflag, size = 0x8, scoped, tag = 'scoped memory for tpu_custom_call.1']
    #allocation5 [shape = 'u8[131072]{0}', space=vmem, size = 0x20000, scoped, tag = 'input window, operand 1']
    #allocation6 [shape = 's32[2]{0}', space=sflag, size = 0x8, scoped, tag = 'scoped memory for tpu_custom_call.1']
    #allocation7 [shape = 'u8[65536]{0}', space=vmem, size = 0x10000, scoped, tag = 'output window, operand 0']
    %7 = vsyncpa [#allocation3], 0
    %s8 = scalar_lea.sflag [#allocation3], 1
    %9 = vsyncpa %s8, 0
    %10 = vsyncpa [#allocation6], 0
    %s11 = scalar_lea.sflag [#allocation6], 1
    %12 = vsyncpa %s11, 0
    %13 = vsyncpa [#allocation4], 0
    %s14 = scalar_lea.sflag [#allocation4], 1
    %15 = vsyncpa %s14, 0
    loop: start=0, step=1, limit=14
    $region2: #{tpu_custom_call.1} parent=1 // loop_pre_header
      _
    $region3: #{tpu_custom_call.1} parent=1 // loop_header
      %s17 = sphi 0, %s21
      %p18 = scmp.ge.s32.totalorder %s17, 14
      %s24 = sphi 0, %s43
      %s25 = sphi 0, %s39
      %s26 = sphi 0, %s35
      %s27 = sphi 0, %s24
      %s28 = sphi 0, %s25
      %s29 = sphi 0, %s26
      %s30 = sphi 0, %s27
      %s31 = sphi 0, %s28
      %s32 = sphi 0, %s29
      %s48 = sphi 0, %s50
      %s51 = sphi 0, %s48
      %s52 = sphi 0, %s51
      %s68 = sphi 0, %s52
      %s76 = sphi 0, %s78
      %s79 = sphi 0, %s76
      %s80 = sphi 0, %s79
      %s96 = sphi 0, %s80
      %s104 = sphi 0, %s106
      %s107 = sphi 0, %s104
      %s108 = sphi 0, %s107
      %s124 = sphi 0, %s108
    $region4: #{tpu_custom_call.1} parent=1 // loop_header_branch
      %20 = sbr.rel (%p18) target = $region8
    $region5: #{tpu_custom_call.1} parent=1 // loop_body
      %s22 = ssub.s32 %s17, 1
      %s23 = ssub.s32 %s17, 2
      %s33 = sadd.s32 1, %s26
      %p34 = scmp.ge.s32.totalorder %s33, 3
      %s35 = scalar_select %p34, 0, %s33
      %s36 = sadd.s32 1, %s25
      %s37 = scalar_select %p34, %s36, %s25
      %p38 = scmp.ge.s32.totalorder %s37, 2
      %s39 = scalar_select %p38, 0, %s37
      %s40 = sadd.s32 1, %s24
      %s41 = scalar_select %p38, %s40, %s24
      %p42 = scmp.ge.s32.totalorder %s41, 2
      %s43 = scalar_select %p42, 0, %s41
      %s44 = ssub.s32 %s24, %s43
      %s45 = ssub.s32 %s26, %s35
      %s46 = sor.u32 %s44, %s45
      %p47 = scmp.eq.s32.totalorder %s46, 0
      %s49 = sadd.s32 %s48, 1
      %s50 = scalar_select %p47, %s48, %s49
      %p53 = pneg %p47
      %p54 = scmp.eq.s32.totalorder %s17, 11
      %p55 = por %p53, %p54
      %p56 = scmp.ne.s32.totalorder %s48, %s51
      %p57 = scmp.eq.s32.totalorder %s17, 0
      %p58 = por %p56, %p57
      %p59 = scmp.ne.s32.totalorder %s48, %s51
      %p60 = scmp.eq.s32.totalorder %s22, 11
      %p61 = por %p59, %p60
      %p62 = scmp.ne.s32.totalorder %s51, %s52
      %p63 = scmp.eq.s32.totalorder %s22, 0
      %p64 = por %p62, %p63
      %p65 = scmp.ne.s32.totalorder %s51, %s52
      %p66 = scmp.eq.s32.totalorder %s23, 11
      %p67 = por %p65, %p66
      %p69 = scmp.ne.s32.totalorder %s52, %s68
      %p70 = scmp.eq.s32.totalorder %s23, 0
      %p71 = por %p69, %p70
      %s72 = ssub.s32 %s26, %s35
      %s73 = ssub.s32 %s25, %s39
      %s74 = sor.u32 %s72, %s73
      %p75 = scmp.eq.s32.totalorder %s74, 0
      %s77 = sadd.s32 %s76, 1
      %s78 = scalar_select %p75, %s76, %s77
      %p81 = pneg %p75
      %p82 = scmp.eq.s32.totalorder %s17, 11
      %p83 = por %p81, %p82
      %p84 = scmp.ne.s32.totalorder %s76, %s79
      %p85 = scmp.eq.s32.totalorder %s17, 0
      %p86 = por %p84, %p85
      %p87 = scmp.ne.s32.totalorder %s76, %s79
      %p88 = scmp.eq.s32.totalorder %s22, 11
      %p89 = por %p87, %p88
      %p90 = scmp.ne.s32.totalorder %s79, %s80
      %p91 = scmp.eq.s32.totalorder %s22, 0
      %p92 = por %p90, %p91
      %p93 = scmp.ne.s32.totalorder %s79, %s80
      %p94 = scmp.eq.s32.totalorder %s23, 11
      %p95 = por %p93, %p94
      %p97 = scmp.ne.s32.totalorder %s80, %s96
      %p98 = scmp.eq.s32.totalorder %s23, 0
      %p99 = por %p97, %p98
      %s100 = ssub.s32 %s24, %s43
      %s101 = ssub.s32 %s25, %s39
      %s102 = sor.u32 %s100, %s101
      %p103 = scmp.eq.s32.totalorder %s102, 0
      %s105 = sadd.s32 %s104, 1
      %s106 = scalar_select %p103, %s104, %s105
      %p109 = pneg %p103
      %p110 = scmp.eq.s32.totalorder %s17, 11
      %p111 = por %p109, %p110
      %p112 = scmp.ne.s32.totalorder %s104, %s107
      %p113 = scmp.eq.s32.totalorder %s17, 0
      %p114 = por %p112, %p113
      %p115 = scmp.ne.s32.totalorder %s104, %s107
      %p116 = scmp.eq.s32.totalorder %s22, 11
      %p117 = por %p115, %p116
      %p118 = scmp.ne.s32.totalorder %s107, %s108
      %p119 = scmp.eq.s32.totalorder %s22, 0
      %p120 = por %p118, %p119
      %p121 = scmp.ne.s32.totalorder %s107, %s108
      %p122 = scmp.eq.s32.totalorder %s23, 11
      %p123 = por %p121, %p122
      %p125 = scmp.ne.s32.totalorder %s108, %s124
      %p126 = scmp.eq.s32.totalorder %s23, 0
      %p127 = por %p125, %p126
      %p128 = scmp.le.s32.totalorder 1, %s17
      %p129 = scmp.lt.s32.totalorder %s17, 13
      %p130 = pnand %p128, %p129
      %p131 = pneg %p130
      // Predicated region
      $region9: #{tpu_custom_call.1} parent=5 // pred_check
        _
      $region10: #{tpu_custom_call.1} parent=5 // pred_check_branch
        %133 = sbr.rel (%p130) target = $region12
      $region11: #{tpu_custom_call.1} parent=5 // pred_region
        %s134 = ssub.s32 %s17, 1
      $region12: #{tpu_custom_call.1} parent=5 // pred_fallthru
        _
      %p135 = scmp.lt.s32.totalorder %s17, 12
      // Predicated region
      $region13: #{tpu_custom_call.1} parent=5 // pred_check
        %p136 = pneg %p135
      $region14: #{tpu_custom_call.1} parent=5 // pred_check_branch
        %138 = sbr.rel (%p136) target = $region16
      $region15: #{tpu_custom_call.1} parent=5 // pred_region
        // Predicated region
        $region17: #{tpu_custom_call.1} parent=15 // pred_check
          %p139 = pneg %p58
        $region18: #{tpu_custom_call.1} parent=15 // pred_check_branch
          %141 = sbr.rel (%p139) target = $region20
        $region19: #{tpu_custom_call.1} parent=15 // pred_region
          %s142 = sand.u32 %s48, 1
          %s143 = scalar_lea.sflag [#allocation3], %s142
          %s144 = sand.u32 %s48, 1
          %s145 = smul.addr %s144, 64
          %s146 = scalar_lea.vmem [#allocation2], %s145
          %s147 = smul.u32 8, %s24
          %s149 = ssub.s32 1024, 1024
          %150 = vsyncadd %s143, %s149
          %s151 = smul.addr %s147, 3
          %s152 = sadd.s32 %s26, %s151
          %s153 = smul.addr %s152, 128
          %s154 = scalar_lea.hbm %s0, %s153
          %s155 = sshll.u32 %s146, 4
          %s156 = int_to_ptr.vmem [resolvable:$true] %s155
          %161 = dma.hbm_to_vmem [thread:$0]  %s154, 1024, %s156, %s143, 384, 128, 8
        $region20: #{tpu_custom_call.1} parent=15 // pred_fallthru
          _
        // Predicated region
        $region21: #{tpu_custom_call.1} parent=15 // pred_check
          %p162 = pneg %p86
        $region22: #{tpu_custom_call.1} parent=15 // pred_check_branch
          %164 = sbr.rel (%p162) target = $region24
        $region23: #{tpu_custom_call.1} parent=15 // pred_region
          %s165 = sand.u32 %s76, 1
          %s166 = scalar_lea.sflag [#allocation6], %s165
          %s167 = sand.u32 %s76, 1
          %s168 = smul.addr %s167, 128
          %s169 = scalar_lea.vmem [#allocation5], %s168
          %s170 = smul.u32 16, %s26
          %s172 = ssub.s32 2048, 2048
          %173 = vsyncadd %s166, %s172
          %s174 = smul.addr %s170, 2
          %s175 = sadd.s32 %s25, %s174
          %s176 = smul.addr %s175, 128
          %s177 = scalar_lea.hbm %s1, %s176
          %s178 = sshll.u32 %s169, 4
          %s179 = int_to_ptr.vmem [resolvable:$true] %s178
          %184 = dma.hbm_to_vmem [thread:$0]  %s177, 2048, %s179, %s166, 256, 128, 8
        $region24: #{tpu_custom_call.1} parent=15 // pred_fallthru
          _
      $region16: #{tpu_custom_call.1} parent=5 // pred_fallthru
        _
      %p185 = scmp.le.s32.totalorder 1, %s17
      %p186 = scmp.lt.s32.totalorder %s17, 13
      %p187 = pnand %p185, %p186
      %p188 = pneg %p187
      // Predicated region
      $region25: #{tpu_custom_call.1} parent=5 // pred_check
        _
      $region26: #{tpu_custom_call.1} parent=5 // pred_check_branch
        %190 = sbr.rel (%p187) target = $region28
      $region27: #{tpu_custom_call.1} parent=5 // pred_region
        %s191 = ssub.s32 %s17, 1
        %s192 = sand.u32 %s51, 1
        %s193 = scalar_lea.sflag [#allocation3], %s192
        %s194 = sand.u32 %s51, 1
        %s195 = smul.addr %s194, 64
        %s196 = scalar_lea.vmem [#allocation2], %s195
        // Predicated region
        $region29: #{tpu_custom_call.1} parent=27 // pred_check
          %p197 = pneg %p64
        $region30: #{tpu_custom_call.1} parent=27 // pred_check_branch
          %199 = sbr.rel (%p197) target = $region32
        $region31: #{tpu_custom_call.1} parent=27 // pred_region
          %200 = dma.done %s193, 1024
        $region32: #{tpu_custom_call.1} parent=27 // pred_fallthru
          _
        %s201 = sand.u32 %s79, 1
        %s202 = scalar_lea.sflag [#allocation6], %s201
        %s203 = sand.u32 %s79, 1
        %s204 = smul.addr %s203, 128
        %s205 = scalar_lea.vmem [#allocation5], %s204
        // Predicated region
        $region33: #{tpu_custom_call.1} parent=27 // pred_check
          %p206 = pneg %p92
        $region34: #{tpu_custom_call.1} parent=27 // pred_check_branch
          %208 = sbr.rel (%p206) target = $region36
        $region35: #{tpu_custom_call.1} parent=27 // pred_region
          %209 = dma.done %s202, 2048
        $region36: #{tpu_custom_call.1} parent=27 // pred_fallthru
          _
        %s210 = sand.u32 %s51, 1
        %s211 = scalar_lea.sflag [#allocation3], %s210
        %s212 = sand.u32 %s51, 1
        %s213 = smul.addr %s212, 64
        %s214 = scalar_lea.vmem [#allocation2], %s213
        %p215 = pneg %p64
        %p216 = pneg %p61
        %s217 = sand.u32 %s79, 1
        %s218 = scalar_lea.sflag [#allocation6], %s217
        %s219 = sand.u32 %s79, 1
        %s220 = smul.addr %s219, 128
        %s221 = scalar_lea.vmem [#allocation5], %s220
        %p222 = pneg %p92
        %p223 = pneg %p89
        %p224 = pneg %p120
        %p225 = pneg %p117
        %s226 = sand.u32 %s107, 1
        %s227 = scalar_lea.sflag [#allocation4], %s226
        %s228 = sand.u32 %s107, 1
        %s229 = smul.addr %s228, 64
        %s230 = scalar_lea.vmem [#allocation7], %s229
        %s231 = smul.u32 8, %s27
        %s232 = smul.u32 16, %s29
        %s233 = smul.u32 8, %s27
        %v234 = vld [vmem:[%s196] sm:$0xff]
        %v235 = vld [vmem:[%s196 + $0x8] sm:$0xff]
        %v236 = vld [vmem:[%s196 + $0x10] sm:$0xff]
        %v237 = vld [vmem:[%s196 + $0x18] sm:$0xff]
        %v238 = vld [vmem:[%s196 + $0x20] sm:$0xff]
        %v239 = vld [vmem:[%s196 + $0x28] sm:$0xff]
        %v240 = vld [vmem:[%s196 + $0x30] sm:$0xff]
        %v241 = vld [vmem:[%s196 + $0x38] sm:$0xff]
        %v242 = vld [vmem:[%s205] sm:$0xff]
        %v243 = vld [vmem:[%s205 + $0x8] sm:$0xff]
        %v244 = vld [vmem:[%s205 + $0x10] sm:$0xff]
        %v245 = vld [vmem:[%s205 + $0x18] sm:$0xff]
        %v246 = vld [vmem:[%s205 + $0x20] sm:$0xff]
        %v247 = vld [vmem:[%s205 + $0x28] sm:$0xff]
        %v248 = vld [vmem:[%s205 + $0x30] sm:$0xff]
        %v249 = vld [vmem:[%s205 + $0x38] sm:$0xff]
        %v250 = vld [vmem:[%s205 + $0x40] sm:$0xff]
        %v251 = vld [vmem:[%s205 + $0x48] sm:$0xff]
        %v252 = vld [vmem:[%s205 + $0x50] sm:$0xff]
        %v253 = vld [vmem:[%s205 + $0x58] sm:$0xff]
        %v254 = vld [vmem:[%s205 + $0x60] sm:$0xff]
        %v255 = vld [vmem:[%s205 + $0x68] sm:$0xff]
        %v256 = vld [vmem:[%s205 + $0x70] sm:$0xff]
        %v257 = vld [vmem:[%s205 + $0x78] sm:$0xff]
        %258 = vmatprep.subr.mxu0 0.0
        %259 = vmatpush1.msra.mxu0 %v242
        %260 = vmatprep.subr.mxu0 0.0
        %261 = vmatpush1.msra.mxu0 %v243
        %262 = vmatprep.subr.mxu0 0.0
        %263 = vmatpush1.msra.mxu0 %v244
        %264 = vmatprep.subr.mxu0 0.0
        %265 = vmatpush1.msra.mxu0 %v245
        %266 = vmatprep.subr.mxu0 0.0
        %267 = vmatpush1.msra.mxu0 %v246
        %268 = vmatprep.subr.mxu0 0.0
        %269 = vmatpush1.msra.mxu0 %v247
        %270 = vmatprep.subr.mxu0 0.0
        %271 = vmatpush1.msra.mxu0 %v248
        %272 = vmatprep.subr.mxu0 0.0
        %273 = vmatpush1.msra.mxu0 %v249
        %274 = vmatprep.subr.mxu0 0.0
        %275 = vmatpush1.msra.mxu0 %v250
        %276 = vmatprep.subr.mxu0 0.0
        %277 = vmatpush1.msra.mxu0 %v251
        %278 = vmatprep.subr.mxu0 0.0
        %279 = vmatpush1.msra.mxu0 %v252
        %280 = vmatprep.subr.mxu0 0.0
        %281 = vmatpush1.msra.mxu0 %v253
        %282 = vmatprep.subr.mxu0 0.0
        %283 = vmatpush1.msra.mxu0 %v254
        %284 = vmatprep.subr.mxu0 0.0
        %285 = vmatpush1.msra.mxu0 %v255
        %286 = vmatprep.subr.mxu0 0.0
        %287 = vmatpush1.msra.mxu0 %v256
        %288 = vmatprep.subr.mxu0 0.0
        %289 = vmatpush1.msra.mxu0 %v257
        %290 = vmatprep.subr.mxu0 0.0
        %291 = vmatpush1.msra.mxu0 0.0
        %292 = vmatprep.subr.mxu0 0.0
        %293 = vmatpush1.msra.mxu0 0.0
        %294 = vmatprep.subr.mxu0 0.0
        %295 = vmatpush1.msra.mxu0 0.0
        %296 = vmatprep.subr.mxu0 0.0
        %297 = vmatpush1.msra.mxu0 0.0
        %298 = vmatprep.subr.mxu0 0.0
        %299 = vmatpush1.msra.mxu0 0.0
        %300 = vmatprep.subr.mxu0 0.0
        %301 = vmatpush1.msra.mxu0 0.0
        %302 = vmatprep.subr.mxu0 0.0
        %303 = vmatpush1.msra.mxu0 0.0
        %304 = vmatprep.subr.mxu0 0.0
        %305 = vmatpush1.msra.mxu0 0.0
        %306 = vmatprep.subr.mxu0 0.0
        %307 = vmatpush1.msra.mxu0 0.0
        %308 = vmatprep.subr.mxu0 0.0
        %309 = vmatpush1.msra.mxu0 0.0
        %310 = vmatprep.subr.mxu0 0.0
        %311 = vmatpush1.msra.mxu0 0.0
        %312 = vmatprep.subr.mxu0 0.0
        %313 = vmatpush1.msra.mxu0 0.0
        %314 = vmatprep.subr.mxu0 0.0
        %315 = vmatpush1.msra.mxu0 0.0
        %316 = vmatprep.subr.mxu0 0.0
        %317 = vmatpush1.msra.mxu0 0.0
        %318 = vmatprep.subr.mxu0 0.0
        %319 = vmatpush1.msra.mxu0 0.0
        %320 = vmatprep.subr.mxu0 0.0
        %321 = vmatpush1.msra.mxu0 0.0
        %322 = vmatprep.mubr.f32.mxu0 0.0
        %323 = vmatmul.mubr.f32.gmra.mrb[0].mxu0 %v234
        %v324 = vpop.f32.mrb[0].mxu0
        %v325 = vadd.f32 0.0, %v324
        %v326 = vpop.f32.mrb[0].mxu0
        %327 = vmatprep.mubr.f32.mxu0 0.0
        %328 = vmatmul.mubr.f32.gmra.mrb[0].mxu0 %v235
        %v329 = vpop.f32.mrb[0].mxu0
        %v330 = vadd.f32 0.0, %v329
        %v331 = vpop.f32.mrb[0].mxu0
        %332 = vmatprep.mubr.f32.mxu0 0.0
        %333 = vmatmul.mubr.f32.gmra.mrb[0].mxu0 %v236
        %v334 = vpop.f32.mrb[0].mxu0
        %v335 = vadd.f32 0.0, %v334
        %v336 = vpop.f32.mrb[0].mxu0
        %337 = vmatprep.mubr.f32.mxu0 0.0
        %338 = vmatmul.mubr.f32.gmra.mrb[0].mxu0 %v237
        %v339 = vpop.f32.mrb[0].mxu0
        %v340 = vadd.f32 0.0, %v339
        %v341 = vpop.f32.mrb[0].mxu0
        %342 = vmatprep.mubr.f32.mxu0 0.0
        %343 = vmatmul.mubr.f32.gmra.mrb[0].mxu0 %v238
        %v344 = vpop.f32.mrb[0].mxu0
        %v345 = vadd.f32 0.0, %v344
        %v346 = vpop.f32.mrb[0].mxu0
        %347 = vmatprep.mubr.f32.mxu0 0.0
        %348 = vmatmul.mubr.f32.gmra.mrb[0].mxu0 %v239
        %v349 = vpop.f32.mrb[0].mxu0
        %v350 = vadd.f32 0.0, %v349
        %v351 = vpop.f32.mrb[0].mxu0
        %352 = vmatprep.mubr.f32.mxu0 0.0
        %353 = vmatmul.mubr.f32.gmra.mrb[0].mxu0 %v240
        %v354 = vpop.f32.mrb[0].mxu0
        %v355 = vadd.f32 0.0, %v354
        %v356 = vpop.f32.mrb[0].mxu0
        %357 = vmatprep.mubr.f32.mxu0 0.0
        %358 = vmatmul.mubr.f32.gmra.mrb[0].mxu0 %v241
        %v359 = vpop.f32.mrb[0].mxu0
        %v360 = vadd.f32 0.0, %v359
        %v361 = vpop.f32.mrb[0].mxu0
        %362 = vdwg.mxu0
        %p363 = scmp.eq.s32.totalorder %s29, 0
        // Predicated region
        $region37: #{tpu_custom_call.1} parent=27 // pred_check
          %p364 = pneg %p363
        $region38: #{tpu_custom_call.1} parent=27 // pred_check_branch
          %366 = sbr.rel (%p364) target = $region40
        $region39: #{tpu_custom_call.1} parent=27 // pred_region
          %367 = vst [vmem:[%s230] sm:$0xff] %v325
          %368 = vst [vmem:[%s230 + $0x8] sm:$0xff] %v330
          %369 = vst [vmem:[%s230 + $0x10] sm:$0xff] %v335
          %370 = vst [vmem:[%s230 + $0x18] sm:$0xff] %v340
          %371 = vst [vmem:[%s230 + $0x20] sm:$0xff] %v345
          %372 = vst [vmem:[%s230 + $0x28] sm:$0xff] %v350
          %373 = vst [vmem:[%s230 + $0x30] sm:$0xff] %v355
          %374 = vst [vmem:[%s230 + $0x38] sm:$0xff] %v360
        $region40: #{tpu_custom_call.1} parent=27 // pred_fallthru
          _
        %p375 = scmp.gt.s32.totalorder %s29, 0
        // Predicated region
        $region41: #{tpu_custom_call.1} parent=27 // pred_check
          %p376 = pneg %p375
        $region42: #{tpu_custom_call.1} parent=27 // pred_check_branch
          %378 = sbr.rel (%p376) target = $region44
        $region43: #{tpu_custom_call.1} parent=27 // pred_region
          %v379 = vld [vmem:[%s230] sm:$0xff]
          %v380 = vld [vmem:[%s230 + $0x8] sm:$0xff]
          %v381 = vld [vmem:[%s230 + $0x10] sm:$0xff]
          %v382 = vld [vmem:[%s230 + $0x18] sm:$0xff]
          %v383 = vld [vmem:[%s230 + $0x20] sm:$0xff]
          %v384 = vld [vmem:[%s230 + $0x28] sm:$0xff]
          %v385 = vld [vmem:[%s230 + $0x30] sm:$0xff]
          %v386 = vld [vmem:[%s230 + $0x38] sm:$0xff]
          %v387 = vadd.f32 %v379, %v325
          %v388 = vadd.f32 %v380, %v330
          %v389 = vadd.f32 %v381, %v335
          %v390 = vadd.f32 %v382, %v340
          %v391 = vadd.f32 %v383, %v345
          %v392 = vadd.f32 %v384, %v350
          %v393 = vadd.f32 %v385, %v355
          %v394 = vadd.f32 %v386, %v360
          %395 = vst [vmem:[%s230] sm:$0xff] %v387
          %396 = vst [vmem:[%s230 + $0x8] sm:$0xff] %v388
          %397 = vst [vmem:[%s230 + $0x10] sm:$0xff] %v389
          %398 = vst [vmem:[%s230 + $0x18] sm:$0xff] %v390
          %399 = vst [vmem:[%s230 + $0x20] sm:$0xff] %v391
          %400 = vst [vmem:[%s230 + $0x28] sm:$0xff] %v392
          %401 = vst [vmem:[%s230 + $0x30] sm:$0xff] %v393
          %402 = vst [vmem:[%s230 + $0x38] sm:$0xff] %v394
        $region44: #{tpu_custom_call.1} parent=27 // pred_fallthru
          _
        %s403 = sand.u32 %s107, 1
        %s404 = scalar_lea.sflag [#allocation4], %s403
        %s405 = sand.u32 %s107, 1
        %s406 = smul.addr %s405, 64
        %s407 = scalar_lea.vmem [#allocation7], %s406
        // Predicated region
        $region45: #{tpu_custom_call.1} parent=27 // pred_check
          %p408 = pneg %p117
        $region46: #{tpu_custom_call.1} parent=27 // pred_check_branch
          %410 = sbr.rel (%p408) target = $region48
        $region47: #{tpu_custom_call.1} parent=27 // pred_region
          %s411 = smul.u32 8, %s27
          %s413 = ssub.s32 1024, 1024
          %414 = vsyncadd %s404, %s413
          %s415 = smul.addr %s411, 2
          %s416 = sadd.s32 %s28, %s415
          %s417 = smul.addr %s416, 128
          %s418 = scalar_lea.hbm %s2, %s417
          %s419 = sshll.u32 %s407, 4
          %s420 = int_to_ptr.vmem [resolvable:$true] %s419
          %425 = dma.vmem_to_hbm [thread:$0]  %s420, 1024, %s418, %s404, 128, 256, 8
        $region48: #{tpu_custom_call.1} parent=27 // pred_fallthru
          _
      $region28: #{tpu_custom_call.1} parent=5 // pred_fallthru
        _
      %p426 = scmp.le.s32.totalorder 2, %s17
      // Predicated region
      $region49: #{tpu_custom_call.1} parent=5 // pred_check
        %p427 = pneg %p426
      $region50: #{tpu_custom_call.1} parent=5 // pred_check_branch
        %429 = sbr.rel (%p427) target = $region52
      $region51: #{tpu_custom_call.1} parent=5 // pred_region
        %s430 = ssub.s32 %s17, 2
        // Predicated region
        $region53: #{tpu_custom_call.1} parent=51 // pred_check
          %p431 = pneg %p123
        $region54: #{tpu_custom_call.1} parent=51 // pred_check_branch
          %433 = sbr.rel (%p431) target = $region56
        $region55: #{tpu_custom_call.1} parent=51 // pred_region
          %s434 = sand.u32 %s108, 1
          %s435 = scalar_lea.sflag [#allocation4], %s434
          %s436 = sand.u32 %s108, 1
          %s437 = smul.addr %s436, 64
          %s438 = scalar_lea.vmem [#allocation7], %s437
          %439 = dma.done %s435, 1024
        $region56: #{tpu_custom_call.1} parent=51 // pred_fallthru
          _
      $region52: #{tpu_custom_call.1} parent=5 // pred_fallthru
        _
    $region6: #{tpu_custom_call.1} parent=1 // loop_footer
      %s21 = sadd.s32 1, %s17
    $region7: #{tpu_custom_call.1} parent=1 // loop_footer_branch
      %16 = sbr.rel target = $region3
    $region8: #{tpu_custom_call.1} parent=1 // loop_exit
      _
    %440 = vsyncpa [#allocation3], 1
    %s441 = scalar_lea.sflag [#allocation3], 1
    %442 = vsyncpa %s441, 1
    %443 = vsyncpa [#allocation6], 1
    %s444 = scalar_lea.sflag [#allocation6], 1
    %445 = vsyncpa %s444, 1
    %446 = vsyncpa [#allocation4], 1
    %s447 = scalar_lea.sflag [#allocation4], 1
    %448 = vsyncpa %s447, 1

</llo_original>
